<compile_context>
chip_gen: v7x
topology: tpu7x:2x2x1
jax: 0.10.0
libtpu: 0.0.40
codegen_flags: <defaults>
</compile_context>

<pallas_src>
import functools

import jax
import jax.numpy as jnp
from jax import lax
from jax.experimental import pallas as pl
from jax.experimental.pallas import tpu as pltpu


def se_block_kernel(x_ref, w1_ref, w2_ref, cw_ref, cb_ref, o_ref, *, hw_chunk):
    # x_ref : (Bt, C, HW)   VMEM   batched input tile (f32 or bf16)
    # w1_ref: (Cr, C)       VMEM   Linear(C -> C//ratio), no bias
    # w2_ref: (C, Cr)       VMEM   Linear(C//ratio -> C), no bias
    # cw_ref: (1, C)        VMEM   Conv2d(C -> 1, k=1) weight (squeezed)
    # cb_ref: (1, 1)        SMEM   Conv2d bias (scalar)
    # o_ref : (Bt, 1, HW)   VMEM
    bt, c, hw = x_ref.shape
    n_chunks = hw // hw_chunk
    inv_hw = 1.0 / hw

    # ---- Pass 1: global average pool, chunked over HW, f32 accumulation ----
    y = jnp.zeros((bt, c), jnp.float32)
    for j in range(n_chunks):
        xc = x_ref[:, :, pl.ds(j * hw_chunk, hw_chunk)].astype(jnp.float32)
        y = y + jnp.sum(xc, axis=-1)
    y = y * inv_hw                                           # (Bt, C)

    # ---- Excitation: FC1 + ReLU, FC2 + Sigmoid (tiny, MXU) ----
    h = lax.dot_general(y, w1_ref[...].astype(jnp.float32),
                        dimension_numbers=(((1,), (1,)), ((), ())),
                        preferred_element_type=jnp.float32)
    h = jnp.maximum(h, 0.0)                                  # (Bt, Cr)
    s = lax.dot_general(h, w2_ref[...].astype(jnp.float32),
                        dimension_numbers=(((1,), (1,)), ((), ())),
                        preferred_element_type=jnp.float32)
    s = jax.nn.sigmoid(s)                                    # (Bt, C)

    # Fuse the gate into the 1x1-conv weight: eff[b, c] = cw[c] * s[b, c].
    eff = cw_ref[...].astype(jnp.float32) * s                # (Bt, C)
    # Hoist the lane->sublane relayout (C moves to sublanes) out of the loop.
    eff_s = eff[:, :, None]                                  # (Bt, C, 1)
    bias = cb_ref[0, 0]

    # ---- Pass 2: channel contraction, chunked over HW (bounds vreg use) ----
    for j in range(n_chunks):
        xc = x_ref[:, :, pl.ds(j * hw_chunk, hw_chunk)].astype(jnp.float32)
        out_c = jnp.sum(xc * eff_s, axis=1, keepdims=True) + bias  # (Bt,1,chunk)
        o_ref[:, :, pl.ds(j * hw_chunk, hw_chunk)] = out_c.astype(o_ref.dtype)


def _scoped_vmem_limit_bytes():
    """Generation-aware scoped VMEM limit (v5e/v6e: 64 MiB; v7x: <=48 MiB)."""
    phys = 64 * 1024 * 1024          # conservative default (v7x-sized VMEM)
    try:
        info = pltpu.get_tpu_info()
        phys = int(getattr(info, "vmem_capacity_bytes", phys) or phys)
    except Exception:
        pass
    if phys >= 128 * 1024 * 1024:    # v5e / v6e
        return 64 * 1024 * 1024
    return min(48 * 1024 * 1024, (phys * 3) // 4)


def _pick_batch_tile(b, c, hw, x_itemsize, out_itemsize, weight_bytes, scoped_limit):
    """Largest Bt that divides b, double-buffers under the scoped VMEM limit,
    and leaves >=2 parallel grid steps for v7x's two TensorCores."""
    per_batch = c * hw * x_itemsize + hw * out_itemsize
    # x and out blocks are double-buffered by the pipeline; weights are also
    # double-buffered but grid-invariant and small. ~2 MiB compiler headroom.
    budget = max(scoped_limit - 2 * weight_bytes - 2 * 1024 * 1024, per_batch)
    bt = max(1, min(b, budget // (2 * per_batch)))
    if b >= 2:
        bt = min(bt, b // 2)         # >=2 grid steps -> both v7x TCs busy
    bt = max(1, bt)
    while b % bt != 0:
        bt -= 1
    return bt


def _pick_hw_chunk(hw, target=512):
    """Largest divisor of hw that is <= target (keeps per-chunk vreg use bounded)."""
    if hw <= target:
        return hw
    for d in range(target, 127, -1):
        if hw % d == 0:
            return d
    return hw                         # no decent divisor; single full-width pass


def se_block(x, w1, w2, conv_w, conv_b):
    """x: (B, C, H, W) f32/bf16. Returns (B, 1, H, W). Matches SE_Block.forward."""
    b, c, h, w = x.shape
    hw = h * w
    cr = w1.shape[0]

    x2 = x.reshape(b, c, hw)
    cw = conv_w.reshape(1, c).astype(jnp.float32)            # (1, C, 1, 1) -> (1, C)
    cb = conv_b.reshape(1, 1).astype(jnp.float32)

    scoped_limit = _scoped_vmem_limit_bytes()
    weight_bytes = (w1.size + w2.size + c) * 4
    bt = _pick_batch_tile(b, c, hw, x.dtype.itemsize, x.dtype.itemsize,
                          weight_bytes, scoped_limit)
    hw_chunk = _pick_hw_chunk(hw)
    grid = (b // bt,)

    # Advisory cost: memory-bound (~1 flop/byte); lets XLA schedule around it.
    cost = pl.CostEstimate(
        flops=int(4 * b * c * hw + 4 * b * c * cr + b * hw),
        transcendentals=int(b * c),
        bytes_accessed=int(b * c * hw * x.dtype.itemsize
                           + b * hw * x.dtype.itemsize
                           + weight_bytes + 4),
    )

    kernel = functools.partial(se_block_kernel, hw_chunk=hw_chunk)

    out = pl.pallas_call(
        kernel,
        out_shape=jax.ShapeDtypeStruct((b, 1, hw), x.dtype),
        grid=grid,
        in_specs=[
            pl.BlockSpec((bt, c, hw), lambda i: (i, 0, 0)),      # batched x tile
            pl.BlockSpec((cr, c), lambda i: (0, 0)),             # fc1 weight (full)
            pl.BlockSpec((c, cr), lambda i: (0, 0)),             # fc2 weight (full)
            pl.BlockSpec((1, c), lambda i: (0, 0)),              # conv weight (full)
            pl.BlockSpec(memory_space=pltpu.MemorySpace.SMEM),   # conv bias scalar
        ],
        out_specs=pl.BlockSpec((bt, 1, hw), lambda i: (i, 0, 0)),
        compiler_params=pltpu.CompilerParams(
            dimension_semantics=("parallel",),
            vmem_limit_bytes=int(scoped_limit),
        ),
        cost_estimate=cost,
    )(x2, w1, w2, cw, cb)

    return out.reshape(b, 1, h, w)


def se_block_ref(x, w1, w2, conv_w, conv_b):
    """Pure-JAX reference matching the PyTorch forward."""
    b, c, h, w = x.shape
    xf = x.astype(jnp.float32)
    y = jnp.mean(xf, axis=(2, 3))                             # gap -> (B, C)
    y = jnp.maximum(y @ w1.T, 0.0)                            # Linear + ReLU
    y = jax.nn.sigmoid(y @ w2.T)                              # Linear + Sigmoid
    xs = xf * y[:, :, None, None]                             # scale
    out = jnp.einsum('bchw,c->bhw', xs, conv_w.reshape(c)) + conv_b.reshape(())
    return out[:, None, :, :].astype(x.dtype)                 # (B, 1, H, W)


if __name__ == "__main__":
    B, C, H, W = 2, 32, 16, 16
    RATIO = 16
    CR = C // RATIO

    key = jax.random.PRNGKey(0)
    k_x, k_w1, k_w2, k_cw, k_cb = jax.random.split(key, 5)

    x = jax.random.normal(k_x, (B, C, H, W), dtype=jnp.float32)
    # Deterministic synthetic parameters (shapes follow nn.Linear / nn.Conv2d)
    w1 = jax.random.normal(k_w1, (CR, C), dtype=jnp.float32) * 0.2   # Linear(C, C//r)
    w2 = jax.random.normal(k_w2, (C, CR), dtype=jnp.float32) * 0.2   # Linear(C//r, C)
    conv_w = jax.random.normal(k_cw, (1, C, 1, 1), dtype=jnp.float32) * 0.2
    conv_b = jax.random.normal(k_cb, (1,), dtype=jnp.float32) * 0.2

    out = se_block(x, w1, w2, conv_w, conv_b)
    out = jax.block_until_ready(out)

    ref = se_block_ref(x, w1, w2, conv_w, conv_b)
    assert out.shape == (B, 1, H, W)
    assert jnp.allclose(out, ref, atol=1e-4, rtol=1e-4)

    # Exercise the bf16 activation path (f32 accumulation inside the kernel).
    xb = x.astype(jnp.bfloat16)
    out_bf16 = jax.block_until_ready(se_block(xb, w1, w2, conv_w, conv_b))
    ref_bf16 = se_block_ref(xb, w1, w2, conv_w, conv_b)
    assert jnp.allclose(out_bf16.astype(jnp.float32),
                        ref_bf16.astype(jnp.float32), atol=5e-2, rtol=5e-2)

    print("KERNEL_OK")
</pallas_src>

<mosaic_0001>
module attributes {stable_mosaic.version = 11 : i64} {
  func.func @se_block_kernel(%arg0: i32, %arg1: memref<1x32x256xf32, #tpu.memory_space<vmem>>, %arg2: memref<2x32xf32, #tpu.memory_space<vmem>>, %arg3: memref<32x2xf32, #tpu.memory_space<vmem>>, %arg4: memref<1x32xf32, #tpu.memory_space<vmem>>, %arg5: memref<1x1xf32, #tpu.memory_space<smem>>, %arg6: memref<1x1x256xf32, #tpu.memory_space<vmem>>) attributes {dimension_semantics = [#tpu.dimension_semantics<parallel>], iteration_bounds = array<i64: 2>, scalar_prefetch = 0 : i64, scratch_operands = 0 : i64, tpu.core_type = #tpu.core_type<tc>, window_params = [{transform_indices = @transform_0, window_bounds = array<i64: 1, 32, 256>}, {pipeline_mode = #tpu.pipeline_mode<synchronous>, transform_indices = @transform_1, window_bounds = array<i64: 2, 32>}, {pipeline_mode = #tpu.pipeline_mode<synchronous>, transform_indices = @transform_2, window_bounds = array<i64: 32, 2>}, {pipeline_mode = #tpu.pipeline_mode<synchronous>, transform_indices = @transform_3, window_bounds = array<i64: 1, 32>}, {transform_indices = @transform_4, window_bounds = array<i64: 1, 1>}, {transform_indices = @transform_5, window_bounds = array<i64: 1, 1, 256>}]} {
    %cst = arith.constant 0.000000e+00 : f32
    %0 = vector.broadcast %cst : f32 to vector<1x32xf32>
    %c0 = arith.constant 0 : index
    %c0_0 = arith.constant 0 : index
    %c0_1 = arith.constant 0 : index
    %1 = vector.load %arg1[%c0, %c0_0, %c0_1] : memref<1x32x256xf32, #tpu.memory_space<vmem>>, vector<1x32x256xf32>
    %cst_2 = arith.constant dense<0.000000e+00> : vector<1x32xf32>
    %2 = vector.multi_reduction <add>, %1, %cst_2 [2] : vector<1x32x256xf32> to vector<1x32xf32>
    %3 = arith.addf %0, %2 : vector<1x32xf32>
    %cst_3 = arith.constant 3.906250e-03 : f32
    %4 = vector.broadcast %cst_3 : f32 to vector<1x32xf32>
    %5 = arith.mulf %3, %4 : vector<1x32xf32>
    %c0_4 = arith.constant 0 : index
    %c0_5 = arith.constant 0 : index
    %6 = vector.load %arg2[%c0_4, %c0_5] : memref<2x32xf32, #tpu.memory_space<vmem>>, vector<2x32xf32>
    %cst_6 = arith.constant dense<0.000000e+00> : vector<1x2xf32>
    %7 = tpu.matmul %5, %6, %cst_6 {dimension_numbers = #tpu.dot_dimension_numbers<[1], [1], [0], [0], [0, 0, 1, 0], [], []>} : vector<1x32xf32>, vector<2x32xf32>, vector<1x2xf32> -> vector<1x2xf32>
    %cst_7 = arith.constant 0.000000e+00 : f32
    %8 = vector.broadcast %cst_7 : f32 to vector<1x2xf32>
    %9 = arith.maximumf %7, %8 : vector<1x2xf32>
    %c0_8 = arith.constant 0 : index
    %c0_9 = arith.constant 0 : index
    %10 = vector.load %arg3[%c0_8, %c0_9] : memref<32x2xf32, #tpu.memory_space<vmem>>, vector<32x2xf32>
    %cst_10 = arith.constant dense<0.000000e+00> : vector<1x32xf32>
    %11 = tpu.matmul %9, %10, %cst_10 {dimension_numbers = #tpu.dot_dimension_numbers<[1], [1], [0], [0], [0, 0, 1, 0], [], []>} : vector<1x2xf32>, vector<32x2xf32>, vector<1x32xf32> -> vector<1x32xf32>
    %12 = arith.negf %11 : vector<1x32xf32>
    %13 = math.exp %12 : vector<1x32xf32>
    %cst_11 = arith.constant 1.000000e+00 : f32
    %14 = vector.broadcast %cst_11 : f32 to vector<1x32xf32>
    %15 = arith.addf %14, %13 : vector<1x32xf32>
    %16 = arith.divf %14, %15 : vector<1x32xf32>
    %c0_12 = arith.constant 0 : index
    %c0_13 = arith.constant 0 : index
    %17 = vector.load %arg4[%c0_12, %c0_13] : memref<1x32xf32, #tpu.memory_space<vmem>>, vector<1x32xf32>
    %18 = arith.mulf %17, %16 : vector<1x32xf32>
    %19 = vector.shape_cast %18 : vector<1x32xf32> to vector<1x32x1xf32>
    %c0_14 = arith.constant 0 : index
    %c0_15 = arith.constant 0 : index
    %20 = memref.load %arg5[%c0_14, %c0_15] : memref<1x1xf32, #tpu.memory_space<smem>>
    %c0_16 = arith.constant 0 : index
    %c0_17 = arith.constant 0 : index
    %c0_18 = arith.constant 0 : index
    %21 = vector.load %arg1[%c0_16, %c0_17, %c0_18] : memref<1x32x256xf32, #tpu.memory_space<vmem>>, vector<1x32x256xf32>
    %22 = vector.broadcast %19 : vector<1x32x1xf32> to vector<1x32x256xf32>
    %23 = arith.mulf %21, %22 : vector<1x32x256xf32>
    %cst_19 = arith.constant dense<0.000000e+00> : vector<1x256xf32>
    %24 = vector.multi_reduction <add>, %23, %cst_19 [1] : vector<1x32x256xf32> to vector<1x256xf32>
    %25 = vector.shape_cast %24 : vector<1x256xf32> to vector<1x1x256xf32>
    %26 = vector.broadcast %20 : f32 to vector<1x1x256xf32>
    %27 = arith.addf %25, %26 : vector<1x1x256xf32>
    %c0_20 = arith.constant 0 : index
    %c0_21 = arith.constant 0 : index
    %c0_22 = arith.constant 0 : index
    %28 = vector.load %arg6[%c0_20, %c0_21, %c0_22] : memref<1x1x256xf32, #tpu.memory_space<vmem>>, vector<1x1x256xf32>
    tpu.vector_store %arg6[%c0_20, %c0_21, %c0_22], %27 {strides = array<i32>} : memref<1x1x256xf32, #tpu.memory_space<vmem>>, vector<1x1x256xf32>,
    return
  }
  func.func @transform_0(%arg0: i32) -> (i32, i32, i32) {
    %c0_i32 = arith.constant 0 : i32
    %c0_i32_0 = arith.constant 0 : i32
    %c0_i32_1 = arith.constant 0 : i32
    return %arg0, %c0_i32, %c0_i32_0 : i32, i32, i32
  }
  func.func @transform_1(%arg0: i32) -> (i32, i32) {
    %c0_i32 = arith.constant 0 : i32
    %c0_i32_0 = arith.constant 0 : i32
    %c0_i32_1 = arith.constant 0 : i32
    return %c0_i32, %c0_i32_0 : i32, i32
  }
  func.func @transform_2(%arg0: i32) -> (i32, i32) {
    %c0_i32 = arith.constant 0 : i32
    %c0_i32_0 = arith.constant 0 : i32
    %c0_i32_1 = arith.constant 0 : i32
    return %c0_i32, %c0_i32_0 : i32, i32
  }
  func.func @transform_3(%arg0: i32) -> (i32, i32) {
    %c0_i32 = arith.constant 0 : i32
    %c0_i32_0 = arith.constant 0 : i32
    %c0_i32_1 = arith.constant 0 : i32
    return %c0_i32, %c0_i32_0 : i32, i32
  }
  func.func @transform_4(%arg0: i32) -> (i32, i32) {
    %c0_i32 = arith.constant 0 : i32
    %c0_i32_0 = arith.constant 0 : i32
    %c0_i32_1 = arith.constant 0 : i32
    return %c0_i32, %c0_i32_0 : i32, i32
  }
  func.func @transform_5(%arg0: i32) -> (i32, i32, i32) {
    %c0_i32 = arith.constant 0 : i32
    %c0_i32_0 = arith.constant 0 : i32
    %c0_i32_1 = arith.constant 0 : i32
    return %arg0, %c0_i32, %c0_i32_0 : i32, i32, i32
  }
}

</mosaic_0001>

<llo_original>
// kernel: tpu_custom_call.1
$region0: #{tpu_custom_call.1}
  #allocation0 [shape = 'u32[]', space=smem, size = 0x4, offset = 0x4, fixed_abs, tag = 'smem constant byte address 0x4 - core index']
  #allocation1 [shape = 'u32[144,128]{1,0:T(1,128)}', space=vmem, size = 0x12000, scoped, tag = 'internal scratch']
  #allocation2 [shape = 'f32[1,1]{1,0:T(1,128)S(6)}', space=smem, size = 0x200, scoped, tag = 'scoped memory for tpu_custom_call.1']
  %s0 = inlined_call_operand.hbm [shape: f32[2,32,256], index: 0, kind: input, shape index: {}]
  %s1 = inlined_call_operand.vmem [shape: f32[2,32], index: 1, kind: input, shape index: {}]
  %s2 = inlined_call_operand.vmem [shape: f32[32,2], index: 2, kind: input, shape index: {}]
  %s3 = inlined_call_operand.vmem [shape: f32[1,32], index: 3, kind: input, shape index: {}]
  %s4 = inlined_call_operand.<no memory space> [shape: f32[1,1], index: 4, kind: input, shape index: {}]
  %s5 = inlined_call_operand.hbm [shape: f32[2,1,256], index: 5, kind: output, shape index: {}]
  %s6 = sld [smem:[#allocation0]]
  $region57: #{tpu_custom_call.1} parent=0
    _
  %s8 = ssub.s32 1, %s6
  %s9 = scalar_select 0, %s8, %s6
  %10 = sst [smem:[#allocation2]] %s4
  $region1: #{tpu_custom_call.1} parent=0
    #allocation3 [shape = 'u8[65536]{0}', space=vmem, size = 0x10000, scoped, tag = 'input window, operand 0']
    #allocation4 [shape = 's32[2]{0}', space=sflag, size = 0x8, scoped, tag = 'scoped memory for tpu_custom_call.1']
    #allocation5 [shape = 's32[2]{0}', space=sflag, size = 0x8, scoped, tag = 'scoped memory for tpu_custom_call.1']
    #allocation6 [shape = 'u8[2048]{0}', space=vmem, size = 0x800, scoped, tag = 'output window, operand 0']
    %11 = vsyncpa [#allocation4], 0
    %s12 = scalar_lea.sflag [#allocation4], 1
    %13 = vsyncpa %s12, 0
    %14 = vsyncpa [#allocation5], 0
    %s15 = scalar_lea.sflag [#allocation5], 1
    %16 = vsyncpa %s15, 0
    loop: start=0, step=1, limit=4
    $region2: #{tpu_custom_call.1} parent=1 // loop_pre_header
      _
    $region3: #{tpu_custom_call.1} parent=1 // loop_header
      %s18 = sphi 0, %s22
      %p19 = scmp.ge.s32.totalorder %s18, 4
      %s28 = sphi 0, %s30
      %s31 = sphi 0, %s28
      %s32 = sphi 0, %s31
      %s48 = sphi 0, %s32
      %s52 = sphi 0, %s52
      %s54 = sphi 0, %s52
      %s55 = sphi 0, %s54
      %s69 = sphi 0, %s55
      %s73 = sphi 0, %s73
      %s75 = sphi 0, %s73
      %s76 = sphi 0, %s75
      %s90 = sphi 0, %s76
      %s94 = sphi 0, %s94
      %s96 = sphi 0, %s94
      %s97 = sphi 0, %s96
      %s111 = sphi 0, %s97
      %s115 = sphi 0, %s115
      %s117 = sphi 0, %s115
      %s118 = sphi 0, %s117
      %s132 = sphi 0, %s118
      %s138 = sphi 0, %s140
      %s141 = sphi 0, %s138
      %s142 = sphi 0, %s141
      %s158 = sphi 0, %s142
    $region4: #{tpu_custom_call.1} parent=1 // loop_header_branch
      %21 = sbr.rel (%p19) target = $region8
    $region5: #{tpu_custom_call.1} parent=1 // loop_body
      %s23 = ssub.s32 %s18, 1
      %s24 = ssub.s32 %s18, 2
      %s25 = sadd.s32 %s18, 1
      %s26 = ssub.s32 %s18, %s25
      %p27 = scmp.eq.s32.totalorder %s26, 0
      %s29 = sadd.s32 %s28, 1
      %s30 = scalar_select %p27, %s28, %s29
      %p33 = pneg %p27
      %p34 = scmp.eq.s32.totalorder %s18, 1
      %p35 = por %p33, %p34
      %p36 = scmp.ne.s32.totalorder %s28, %s31
      %p37 = scmp.eq.s32.totalorder %s18, 0
      %p38 = por %p36, %p37
      %p39 = scmp.ne.s32.totalorder %s28, %s31
      %p40 = scmp.eq.s32.totalorder %s23, 1
      %p41 = por %p39, %p40
      %p42 = scmp.ne.s32.totalorder %s31, %s32
      %p43 = scmp.eq.s32.totalorder %s23, 0
      %p44 = por %p42, %p43
      %p45 = scmp.ne.s32.totalorder %s31, %s32
      %p46 = scmp.eq.s32.totalorder %s24, 1
      %p47 = por %p45, %p46
      %p49 = scmp.ne.s32.totalorder %s32, %s48
      %p50 = scmp.eq.s32.totalorder %s24, 0
      %p51 = por %p49, %p50
      %s53 = sadd.s32 %s52, 1
      %p56 = scmp.eq.s32.totalorder %s18, 1
      %p57 = scmp.ne.s32.totalorder %s52, %s54
      %p58 = scmp.eq.s32.totalorder %s18, 0
      %p59 = por %p57, %p58
      %p60 = scmp.ne.s32.totalorder %s52, %s54
      %p61 = scmp.eq.s32.totalorder %s23, 1
      %p62 = por %p60, %p61
      %p63 = scmp.ne.s32.totalorder %s54, %s55
      %p64 = scmp.eq.s32.totalorder %s23, 0
      %p65 = por %p63, %p64
      %p66 = scmp.ne.s32.totalorder %s54, %s55
      %p67 = scmp.eq.s32.totalorder %s24, 1
      %p68 = por %p66, %p67
      %p70 = scmp.ne.s32.totalorder %s55, %s69
      %p71 = scmp.eq.s32.totalorder %s24, 0
      %p72 = por %p70, %p71
      %s74 = sadd.s32 %s73, 1
      %p77 = scmp.eq.s32.totalorder %s18, 1
      %p78 = scmp.ne.s32.totalorder %s73, %s75
      %p79 = scmp.eq.s32.totalorder %s18, 0
      %p80 = por %p78, %p79
      %p81 = scmp.ne.s32.totalorder %s73, %s75
      %p82 = scmp.eq.s32.totalorder %s23, 1
      %p83 = por %p81, %p82
      %p84 = scmp.ne.s32.totalorder %s75, %s76
      %p85 = scmp.eq.s32.totalorder %s23, 0
      %p86 = por %p84, %p85
      %p87 = scmp.ne.s32.totalorder %s75, %s76
      %p88 = scmp.eq.s32.totalorder %s24, 1
      %p89 = por %p87, %p88
      %p91 = scmp.ne.s32.totalorder %s76, %s90
      %p92 = scmp.eq.s32.totalorder %s24, 0
      %p93 = por %p91, %p92
      %s95 = sadd.s32 %s94, 1
      %p98 = scmp.eq.s32.totalorder %s18, 1
      %p99 = scmp.ne.s32.totalorder %s94, %s96
      %p100 = scmp.eq.s32.totalorder %s18, 0
      %p101 = por %p99, %p100
      %p102 = scmp.ne.s32.totalorder %s94, %s96
      %p103 = scmp.eq.s32.totalorder %s23, 1
      %p104 = por %p102, %p103
      %p105 = scmp.ne.s32.totalorder %s96, %s97
      %p106 = scmp.eq.s32.totalorder %s23, 0
      %p107 = por %p105, %p106
      %p108 = scmp.ne.s32.totalorder %s96, %s97
      %p109 = scmp.eq.s32.totalorder %s24, 1
      %p110 = por %p108, %p109
      %p112 = scmp.ne.s32.totalorder %s97, %s111
      %p113 = scmp.eq.s32.totalorder %s24, 0
      %p114 = por %p112, %p113
      %s116 = sadd.s32 %s115, 1
      %p119 = scmp.eq.s32.totalorder %s18, 1
      %p120 = scmp.ne.s32.totalorder %s115, %s117
      %p121 = scmp.eq.s32.totalorder %s18, 0
      %p122 = por %p120, %p121
      %p123 = scmp.ne.s32.totalorder %s115, %s117
      %p124 = scmp.eq.s32.totalorder %s23, 1
      %p125 = por %p123, %p124
      %p126 = scmp.ne.s32.totalorder %s117, %s118
      %p127 = scmp.eq.s32.totalorder %s23, 0
      %p128 = por %p126, %p127
      %p129 = scmp.ne.s32.totalorder %s117, %s118
      %p130 = scmp.eq.s32.totalorder %s24, 1
      %p131 = por %p129, %p130
      %p133 = scmp.ne.s32.totalorder %s118, %s132
      %p134 = scmp.eq.s32.totalorder %s24, 0
      %p135 = por %p133, %p134
      %s136 = ssub.s32 %s18, %s25
      %p137 = scmp.eq.s32.totalorder %s136, 0
      %s139 = sadd.s32 %s138, 1
      %s140 = scalar_select %p137, %s138, %s139
      %p143 = pneg %p137
      %p144 = scmp.eq.s32.totalorder %s18, 1
      %p145 = por %p143, %p144
      %p146 = scmp.ne.s32.totalorder %s138, %s141
      %p147 = scmp.eq.s32.totalorder %s18, 0
      %p148 = por %p146, %p147
      %p149 = scmp.ne.s32.totalorder %s138, %s141
      %p150 = scmp.eq.s32.totalorder %s23, 1
      %p151 = por %p149, %p150
      %p152 = scmp.ne.s32.totalorder %s141, %s142
      %p153 = scmp.eq.s32.totalorder %s23, 0
      %p154 = por %p152, %p153
      %p155 = scmp.ne.s32.totalorder %s141, %s142
      %p156 = scmp.eq.s32.totalorder %s24, 1
      %p157 = por %p155, %p156
      %p159 = scmp.ne.s32.totalorder %s142, %s158
      %p160 = scmp.eq.s32.totalorder %s24, 0
      %p161 = por %p159, %p160
      %p162 = scmp.le.s32.totalorder 1, %s18
      %p163 = scmp.lt.s32.totalorder %s18, 3
      %p164 = pnand %p162, %p163
      %p165 = pneg %p164
      // Predicated region
      $region9: #{tpu_custom_call.1} parent=5 // pred_check
        _
      $region10: #{tpu_custom_call.1} parent=5 // pred_check_branch
        %167 = sbr.rel (%p164) target = $region12
      $region11: #{tpu_custom_call.1} parent=5 // pred_region
        %s168 = ssub.s32 %s18, 1
        // Predicated region
        $region13: #{tpu_custom_call.1} parent=11 // pred_check
          %p169 = pneg %p65
        $region14: #{tpu_custom_call.1} parent=11 // pred_check_branch
          %171 = sbr.rel (%p169) target = $region16
        $region15: #{tpu_custom_call.1} parent=11 // pred_region
          _
        $region16: #{tpu_custom_call.1} parent=11 // pred_fallthru
          _
        // Predicated region
        $region17: #{tpu_custom_call.1} parent=11 // pred_check
          %p172 = pneg %p86
        $region18: #{tpu_custom_call.1} parent=11 // pred_check_branch
          %174 = sbr.rel (%p172) target = $region20
        $region19: #{tpu_custom_call.1} parent=11 // pred_region
          _
        $region20: #{tpu_custom_call.1} parent=11 // pred_fallthru
          _
        // Predicated region
        $region21: #{tpu_custom_call.1} parent=11 // pred_check
          %p175 = pneg %p107
        $region22: #{tpu_custom_call.1} parent=11 // pred_check_branch
          %177 = sbr.rel (%p175) target = $region24
        $region23: #{tpu_custom_call.1} parent=11 // pred_region
          _
        $region24: #{tpu_custom_call.1} parent=11 // pred_fallthru
          _
        // Predicated region
        $region25: #{tpu_custom_call.1} parent=11 // pred_check
          %p178 = pneg %p128
        $region26: #{tpu_custom_call.1} parent=11 // pred_check_branch
          %180 = sbr.rel (%p178) target = $region28
        $region27: #{tpu_custom_call.1} parent=11 // pred_region
          _
        $region28: #{tpu_custom_call.1} parent=11 // pred_fallthru
          _
      $region12: #{tpu_custom_call.1} parent=5 // pred_fallthru
        _
      %p181 = scmp.lt.s32.totalorder %s18, 2
      // Predicated region
      $region29: #{tpu_custom_call.1} parent=5 // pred_check
        %p182 = pneg %p181
      $region30: #{tpu_custom_call.1} parent=5 // pred_check_branch
        %184 = sbr.rel (%p182) target = $region32
      $region31: #{tpu_custom_call.1} parent=5 // pred_region
        // Predicated region
        $region33: #{tpu_custom_call.1} parent=31 // pred_check
          %p185 = pneg %p38
        $region34: #{tpu_custom_call.1} parent=31 // pred_check_branch
          %187 = sbr.rel (%p185) target = $region36
        $region35: #{tpu_custom_call.1} parent=31 // pred_region
          %s188 = sand.u32 %s28, 1
          %s189 = scalar_lea.sflag [#allocation4], %s188
          %s190 = sand.u32 %s28, 1
          %s191 = smul.addr %s190, 64
          %s192 = scalar_lea.vmem [#allocation3], %s191
          %s194 = ssub.s32 1024, 1024
          %195 = vsyncadd %s189, %s194
          %s196 = smul.addr %s18, 8
          %s197 = smul.addr %s196, 128
          %s198 = scalar_lea.hbm %s0, %s197
          %s199 = sshll.u32 %s192, 4
          %s200 = int_to_ptr.vmem [resolvable:$true] %s199
          %205 = dma.hbm_to_vmem [thread:$0]  %s198, 1024, %s200, %s189, 256, 256, 16
        $region36: #{tpu_custom_call.1} parent=31 // pred_fallthru
          _
      $region32: #{tpu_custom_call.1} parent=5 // pred_fallthru
        _
      %p206 = scmp.le.s32.totalorder 1, %s18
      %p207 = scmp.lt.s32.totalorder %s18, 3
      %p208 = pnand %p206, %p207
      %p209 = pneg %p208
      // Predicated region
      $region37: #{tpu_custom_call.1} parent=5 // pred_check
        _
      $region38: #{tpu_custom_call.1} parent=5 // pred_check_branch
        %211 = sbr.rel (%p208) target = $region40
      $region39: #{tpu_custom_call.1} parent=5 // pred_region
        %s212 = ssub.s32 %s18, 1
        %s213 = sand.u32 %s31, 1
        %s214 = scalar_lea.sflag [#allocation4], %s213
        %s215 = sand.u32 %s31, 1
        %s216 = smul.addr %s215, 64
        %s217 = scalar_lea.vmem [#allocation3], %s216
        // Predicated region
        $region41: #{tpu_custom_call.1} parent=39 // pred_check
          %p218 = pneg %p44
        $region42: #{tpu_custom_call.1} parent=39 // pred_check_branch
          %220 = sbr.rel (%p218) target = $region44
        $region43: #{tpu_custom_call.1} parent=39 // pred_region
          %221 = dma.done %s214, 1024
        $region44: #{tpu_custom_call.1} parent=39 // pred_fallthru
          _
        %s222 = sand.u32 %s31, 1
        %s223 = scalar_lea.sflag [#allocation4], %s222
        %s224 = sand.u32 %s31, 1
        %s225 = smul.addr %s224, 64
        %s226 = scalar_lea.vmem [#allocation3], %s225
        %p227 = pneg %p44
        %p228 = pneg %p41
        %p229 = pneg %p65
        %p230 = pneg %p62
        %p231 = pneg %p86
        %p232 = pneg %p83
        %p233 = pneg %p107
        %p234 = pneg %p104
        %p235 = pneg %p128
        %p236 = pneg %p125
        %p237 = pneg %p154
        %p238 = pneg %p151
        %s239 = sand.u32 %s141, 1
        %s240 = scalar_lea.sflag [#allocation5], %s239
        %s241 = sand.u32 %s141, 1
        %s242 = smul.addr %s241, 2
        %s243 = scalar_lea.vmem [#allocation6], %s242
        %v244 = vld [vmem:[%s217] sm:$0xff]
        %v245 = vld [vmem:[%s217 + $0x8] sm:$0xff]
        %v246 = vld [vmem:[%s217 + $0x10] sm:$0xff]
        %v247 = vld [vmem:[%s217 + $0x18] sm:$0xff]
        %v248 = vld [vmem:[%s217 + $0x20] sm:$0xff]
        %v249 = vld [vmem:[%s217 + $0x28] sm:$0xff]
        %v250 = vld [vmem:[%s217 + $0x30] sm:$0xff]
        %v251 = vld [vmem:[%s217 + $0x38] sm:$0xff]
        %v252 = vadd.f32 %v244, %v245
        %253 = vadd.xlane.f32.xlu0 %v252
        %v254 = vpop.xlane.xlu0 %253
        %v255 = vadd.f32 %v246, %v247
        %256 = vadd.xlane.f32.xlu0 %v255
        %v257 = vpop.xlane.xlu0 %256
        %v258 = vadd.f32 %v248, %v249
        %259 = vadd.xlane.f32.xlu0 %v258
        %v260 = vpop.xlane.xlu0 %259
        %v261 = vadd.f32 %v250, %v251
        %262 = vadd.xlane.f32.xlu0 %v261
        %v263 = vpop.xlane.xlu0 %262
        %v264 = vadd.f32 %v254, 0.0
        %v265 = vadd.f32 %v257, 0.0
        %v266 = vadd.f32 %v260, 0.0
        %v267 = vadd.f32 %v263, 0.0
        %v268 = vmul.f32 %v264, 0.00390625
        %v269 = vmul.f32 %v265, 0.00390625
        %v270 = vmul.f32 %v266, 0.00390625
        %v271 = vmul.f32 %v267, 0.00390625
        %v272 = vld [vmem:[%s1] sm:$0x3]
        %v277 = vlaneseq
        %v278 = vand.u32 %v277, 127
        %v279 = vlaneseq
        %v280 = vshrl.u32 %v279, 7
        %v281 = vsub.s32 %v278, %v280
        %v282 = vrot.slane %v268, %v281
        %v283 = vadd.s32 %v278, 4294967288
        %v284 = vlaneseq
        %v285 = vshrl.u32 %v284, 7
        %v286 = vsub.s32 %v283, %v285
        %v287 = vrot.slane %v269, %v286
        %vm288 = vcmask 130112
        %v289 = vsel %vm288, %v287, %v282
        %v290 = vadd.s32 %v278, 4294967280
        %v291 = vlaneseq
        %v292 = vshrl.u32 %v291, 7
        %v293 = vsub.s32 %v290, %v292
        %v294 = vrot.slane %v270, %v293
        %vm295 = vcmask 195712
        %v296 = vsel %vm295, %v294, %v289
        %v297 = vadd.s32 %v278, 4294967272
        %v298 = vlaneseq
        %v299 = vshrl.u32 %v298, 7
        %v300 = vsub.s32 %v297, %v299
        %v301 = vrot.slane %v271, %v300
        %vm302 = vcmask 261312
        %v303 = vsel %vm302, %v301, %v296
        %vm304 = vcmask 261120
        %v305 = vsel %vm304, %v303, 0
        %v308 = vsel %vm304, %v272, 0
        %310 = vmatprep.subr.mxu0 0.0
        %311 = vmatpush1.xpose.msra.mxu0 %v308
        %312 = vmatprep.subr.mxu0 0.0
        %313 = vmatpush1.xpose.msra.mxu0 0.0
        %314 = vmatprep.subr.mxu0 0.0
        %315 = vmatpush1.xpose.msra.mxu0 0.0
        %316 = vmatprep.subr.mxu0 0.0
        %317 = vmatpush1.xpose.msra.mxu0 0.0
        %318 = vmatprep.subr.mxu0 0.0
        %319 = vmatpush1.xpose.msra.mxu0 0.0
        %320 = vmatprep.subr.mxu0 0.0
        %321 = vmatpush1.xpose.msra.mxu0 0.0
        %322 = vmatprep.subr.mxu0 0.0
        %323 = vmatpush1.xpose.msra.mxu0 0.0
        %324 = vmatprep.subr.mxu0 0.0
        %325 = vmatpush1.xpose.msra.mxu0 0.0
        %326 = vmatprep.subr.mxu0 0.0
        %327 = vmatpush1.xpose.msra.mxu0 0.0
        %328 = vmatprep.subr.mxu0 0.0
        %329 = vmatpush1.xpose.msra.mxu0 0.0
        %330 = vmatprep.subr.mxu0 0.0
        %331 = vmatpush1.xpose.msra.mxu0 0.0
        %332 = vmatprep.subr.mxu0 0.0
        %333 = vmatpush1.xpose.msra.mxu0 0.0
        %334 = vmatprep.subr.mxu0 0.0
        %335 = vmatpush1.xpose.msra.mxu0 0.0
        %336 = vmatprep.subr.mxu0 0.0
        %337 = vmatpush1.xpose.msra.mxu0 0.0
        %338 = vmatprep.subr.mxu0 0.0
        %339 = vmatpush1.xpose.msra.mxu0 0.0
        %340 = vmatprep.subr.mxu0 0.0
        %341 = vmatpush1.xpose.msra.mxu0 0.0
        %342 = vmatprep.subr.mxu0 0.0
        %343 = vmatpush1.xpose.msra.mxu0 0.0
        %344 = vmatprep.subr.mxu0 0.0
        %345 = vmatpush1.xpose.msra.mxu0 0.0
        %346 = vmatprep.subr.mxu0 0.0
        %347 = vmatpush1.xpose.msra.mxu0 0.0
        %348 = vmatprep.subr.mxu0 0.0
        %349 = vmatpush1.xpose.msra.mxu0 0.0
        %350 = vmatprep.subr.mxu0 0.0
        %351 = vmatpush1.xpose.msra.mxu0 0.0
        %352 = vmatprep.subr.mxu0 0.0
        %353 = vmatpush1.xpose.msra.mxu0 0.0
        %354 = vmatprep.subr.mxu0 0.0
        %355 = vmatpush1.xpose.msra.mxu0 0.0
        %356 = vmatprep.subr.mxu0 0.0
        %357 = vmatpush1.xpose.msra.mxu0 0.0
        %358 = vmatprep.subr.mxu0 0.0
        %359 = vmatpush1.xpose.msra.mxu0 0.0
        %360 = vmatprep.subr.mxu0 0.0
        %361 = vmatpush1.xpose.msra.mxu0 0.0
        %362 = vmatprep.subr.mxu0 0.0
        %363 = vmatpush1.xpose.msra.mxu0 0.0
        %364 = vmatprep.subr.mxu0 0.0
        %365 = vmatpush1.xpose.msra.mxu0 0.0
        %366 = vmatprep.subr.mxu0 0.0
        %367 = vmatpush1.xpose.msra.mxu0 0.0
        %368 = vmatprep.subr.mxu0 0.0
        %369 = vmatpush1.xpose.msra.mxu0 0.0
        %370 = vmatprep.subr.mxu0 0.0
        %371 = vmatpush1.xpose.msra.mxu0 0.0
        %372 = vmatprep.subr.mxu0 0.0
        %373 = vmatpush1.xpose.msra.mxu0 0.0
        %374 = vmatprep.mubr.f32.mxu0 0.0
        %375 = vmatmul.mubr.f32.gmra.mrb[0].mxu0 %v305
        %v376 = vpop.f32.mrb[0].mxu0
        %v377 = vadd.f32 0.0, %v376
        %v378 = vpop.f32.mrb[0].mxu0
        %379 = vdwg.mxu0
        %v380 = vmax.f32 %v377, 0.0
        %v381 = vld [vmem:[%s2] sm:$0xff]
        %v382 = vld [vmem:[%s2 + $0x8] sm:$0xff]
        %v383 = vld [vmem:[%s2 + $0x10] sm:$0xff]
        %v384 = vld [vmem:[%s2 + $0x18] sm:$0xff]
        %vm385 = vcmask 15360
        %v387 = vsel %vm385, %v380, 0
        %v390 = vsel %vm385, %v381, 0
        %v393 = vsel %vm385, %v382, 0
        %v396 = vsel %vm385, %v383, 0
        %v399 = vsel %vm385, %v384, 0
        %401 = vmatprep.subr.mxu0 0.0
        %402 = vmatpush1.xpose.msra.mxu0 %v390
        %403 = vmatprep.subr.mxu0 0.0
        %404 = vmatpush1.xpose.msra.mxu0 %v393
        %405 = vmatprep.subr.mxu0 0.0
        %406 = vmatpush1.xpose.msra.mxu0 %v396
        %407 = vmatprep.subr.mxu0 0.0
        %408 = vmatpush1.xpose.msra.mxu0 %v399
        %409 = vmatprep.subr.mxu0 0.0
        %410 = vmatpush1.xpose.msra.mxu0 0.0
        %411 = vmatprep.subr.mxu0 0.0
        %412 = vmatpush1.xpose.msra.mxu0 0.0
        %413 = vmatprep.subr.mxu0 0.0
        %414 = vmatpush1.xpose.msra.mxu0 0.0
        %415 = vmatprep.subr.mxu0 0.0
        %416 = vmatpush1.xpose.msra.mxu0 0.0
        %417 = vmatprep.subr.mxu0 0.0
        %418 = vmatpush1.xpose.msra.mxu0 0.0
        %419 = vmatprep.subr.mxu0 0.0
        %420 = vmatpush1.xpose.msra.mxu0 0.0
        %421 = vmatprep.subr.mxu0 0.0
        %422 = vmatpush1.xpose.msra.mxu0 0.0
        %423 = vmatprep.subr.mxu0 0.0
        %424 = vmatpush1.xpose.msra.mxu0 0.0
        %425 = vmatprep.subr.mxu0 0.0
        %426 = vmatpush1.xpose.msra.mxu0 0.0
        %427 = vmatprep.subr.mxu0 0.0
        %428 = vmatpush1.xpose.msra.mxu0 0.0
        %429 = vmatprep.subr.mxu0 0.0
        %430 = vmatpush1.xpose.msra.mxu0 0.0
        %431 = vmatprep.subr.mxu0 0.0
        %432 = vmatpush1.xpose.msra.mxu0 0.0
        %433 = vmatprep.subr.mxu0 0.0
        %434 = vmatpush1.xpose.msra.mxu0 0.0
        %435 = vmatprep.subr.mxu0 0.0
        %436 = vmatpush1.xpose.msra.mxu0 0.0
        %437 = vmatprep.subr.mxu0 0.0
        %438 = vmatpush1.xpose.msra.mxu0 0.0
        %439 = vmatprep.subr.mxu0 0.0
        %440 = vmatpush1.xpose.msra.mxu0 0.0
        %441 = vmatprep.subr.mxu0 0.0
        %442 = vmatpush1.xpose.msra.mxu0 0.0
        %443 = vmatprep.subr.mxu0 0.0
        %444 = vmatpush1.xpose.msra.mxu0 0.0
        %445 = vmatprep.subr.mxu0 0.0
        %446 = vmatpush1.xpose.msra.mxu0 0.0
        %447 = vmatprep.subr.mxu0 0.0
        %448 = vmatpush1.xpose.msra.mxu0 0.0
        %449 = vmatprep.subr.mxu0 0.0
        %450 = vmatpush1.xpose.msra.mxu0 0.0
        %451 = vmatprep.subr.mxu0 0.0
        %452 = vmatpush1.xpose.msra.mxu0 0.0
        %453 = vmatprep.subr.mxu0 0.0
        %454 = vmatpush1.xpose.msra.mxu0 0.0
        %455 = vmatprep.subr.mxu0 0.0
        %456 = vmatpush1.xpose.msra.mxu0 0.0
        %457 = vmatprep.subr.mxu0 0.0
        %458 = vmatpush1.xpose.msra.mxu0 0.0
        %459 = vmatprep.subr.mxu0 0.0
        %460 = vmatpush1.xpose.msra.mxu0 0.0
        %461 = vmatprep.subr.mxu0 0.0
        %462 = vmatpush1.xpose.msra.mxu0 0.0
        %463 = vmatprep.subr.mxu0 0.0
        %464 = vmatpush1.xpose.msra.mxu0 0.0
        %465 = vmatprep.mubr.f32.mxu0 0.0
        %466 = vmatmul.mubr.f32.gmra.mrb[0].mxu0 %v387
        %v467 = vpop.f32.mrb[0].mxu0
        %v468 = vadd.f32 0.0, %v467
        %v469 = vpop.f32.mrb[0].mxu0
        %470 = vdwg.mxu0
        %v471 = vxor.u32 %v468, 2147483648
        %v472 = vmul.f32 %v471, 1.442695
        %v473 = vpow.pop %v472
        %v474 = vadd.f32 %v473, 1.0
        %v475 = vrcp.pop %v474
        %v476 = vmul.f32 1.0, %v475
        %v477 = vld [vmem:[%s3] sm:$0x1]
        %v478 = vmul.f32 %v477, %v476
        %v479 = vlaneseq
        %v480 = vshrl.u32 %v479, 7
        %v481 = vsub.s32 0, %v480
        %v482 = vrot.slane %v478, %v481
        %484 = vbcast.lane.b32.xlu0 %v482, 256
        %v485 = vpop.permute.xlu0 %484
        %s487 = sor.u32 256, 8
        %488 = vbcast.lane.b32.xlu0 %v482, %s487
        %v489 = vpop.permute.xlu0 %488
        %s491 = sor.u32 256, 16
        %492 = vbcast.lane.b32.xlu0 %v482, %s491
        %v493 = vpop.permute.xlu0 %492
        %s495 = sor.u32 256, 24
        %496 = vbcast.lane.b32.xlu0 %v482, %s495
        %v497 = vpop.permute.xlu0 %496
        %s498 = sld [smem:[#allocation2]]
        %v499 = vmul.f32 %v244, %v485
        %v500 = vmul.f32 %v245, %v485
        %v501 = vmul.f32 %v246, %v489
        %v502 = vmul.f32 %v247, %v489
        %v503 = vmul.f32 %v248, %v493
        %v504 = vmul.f32 %v249, %v493
        %v505 = vmul.f32 %v250, %v497
        %v506 = vmul.f32 %v251, %v497
        %v507 = vadd.f32 %v499, %v501
        %v508 = vadd.f32 %v507, %v503
        %v509 = vadd.f32 %v508, %v505
        %v510 = vrot.slane %v509, 4
        %v511 = vadd.f32 %v509, %v510
        %v512 = vrot.slane %v511, 2
        %v513 = vadd.f32 %v511, %v512
        %v514 = vrot.slane %v513, 1
        %v515 = vadd.f32 %v513, %v514
        %v516 = vadd.f32 %v500, %v502
        %v517 = vadd.f32 %v516, %v504
        %v518 = vadd.f32 %v517, %v506
        %v519 = vrot.slane %v518, 4
        %v520 = vadd.f32 %v518, %v519
        %v521 = vrot.slane %v520, 2
        %v522 = vadd.f32 %v520, %v521
        %v523 = vrot.slane %v522, 1
        %v524 = vadd.f32 %v522, %v523
        %v525 = vstv %s498
        %v526 = vadd.f32 %v515, %v525
        %v527 = vadd.f32 %v524, %v525
        %v530 = vcombine.low %v526, %v527
        %v532 = vunpack.c.l.s4 1966171168
        %v533 = vunpack.c.0.s8 %v532
        %v534 = vlaneseq
        %v535 = vshrl.u32 %v534, 7
        %v536 = vsub.s32 %v533, %v535
        %v537 = vrot.slane %v530, %v536
        %v539 = vunpack.c.l.s4 1966171168
        %v540 = vunpack.c.0.s8 %v539
        %v541 = vlaneseq
        %v542 = vshrl.u32 %v541, 7
        %v543 = vsub.s32 %v540, %v542
        %v544 = vrot.slane %v537, %v543
        %v546 = vlaneseq
        %vm547 = vcmp.ge.s32.totalorder %v546, 0
        %vm548 = vcmp.lt.s32.totalorder %v546, 256
        %vm549 = vmand %vm547, %vm548
        %550 = vst.msk [vmem:[%s243] sm:$0x3] %vm549, %v544
        %s551 = sand.u32 %s141, 1
        %s552 = scalar_lea.sflag [#allocation5], %s551
        %s553 = sand.u32 %s141, 1
        %s554 = smul.addr %s553, 2
        %s555 = scalar_lea.vmem [#allocation6], %s554
        // Predicated region
        $region45: #{tpu_custom_call.1} parent=39 // pred_check
          %p556 = pneg %p151
        $region46: #{tpu_custom_call.1} parent=39 // pred_check_branch
          %558 = sbr.rel (%p556) target = $region48
        $region47: #{tpu_custom_call.1} parent=39 // pred_region
          %s560 = ssub.s32 32, 32
          %561 = vsyncadd %s552, %s560
          %s562 = smul.addr %s23, 2
          %s563 = smul.addr %s562, 16
          %s564 = scalar_lea.hbm %s5, %s563
          %s566 = sshll.u32 %s555, 4
          %s567 = int_to_ptr.vmem [resolvable:$true] %s566
          %569 = dma.vmem_to_hbm [thread:$0]  %s567, 32, %s564, %s552
        $region48: #{tpu_custom_call.1} parent=39 // pred_fallthru
          _
      $region40: #{tpu_custom_call.1} parent=5 // pred_fallthru
        _
      %p570 = scmp.le.s32.totalorder 2, %s18
      // Predicated region
      $region49: #{tpu_custom_call.1} parent=5 // pred_check
        %p571 = pneg %p570
      $region50: #{tpu_custom_call.1} parent=5 // pred_check_branch
        %573 = sbr.rel (%p571) target = $region52
      $region51: #{tpu_custom_call.1} parent=5 // pred_region
        %s574 = ssub.s32 %s18, 2
        // Predicated region
        $region53: #{tpu_custom_call.1} parent=51 // pred_check
          %p575 = pneg %p157
        $region54: #{tpu_custom_call.1} parent=51 // pred_check_branch
          %577 = sbr.rel (%p575) target = $region56
        $region55: #{tpu_custom_call.1} parent=51 // pred_region
          %s578 = sand.u32 %s142, 1
          %s579 = scalar_lea.sflag [#allocation5], %s578
          %s580 = sand.u32 %s142, 1
          %s581 = smul.addr %s580, 2
          %s582 = scalar_lea.vmem [#allocation6], %s581
          %583 = dma.done %s579, 32
        $region56: #{tpu_custom_call.1} parent=51 // pred_fallthru
          _
      $region52: #{tpu_custom_call.1} parent=5 // pred_fallthru
        _
    $region6: #{tpu_custom_call.1} parent=1 // loop_footer
      %s22 = sadd.s32 1, %s18
    $region7: #{tpu_custom_call.1} parent=1 // loop_footer_branch
      %17 = sbr.rel target = $region3
    $region8: #{tpu_custom_call.1} parent=1 // loop_exit
      _
    %584 = vsyncpa [#allocation4], 1
    %s585 = scalar_lea.sflag [#allocation4], 1
    %586 = vsyncpa %s585, 1
    %587 = vsyncpa [#allocation5], 1
    %s588 = scalar_lea.sflag [#allocation5], 1
    %589 = vsyncpa %s588, 1

</llo_original>
